<compile_context>
chip_gen: v6e
topology: v6e:2x2x1
jax: 0.10.0
libtpu: 0.0.40
codegen_flags: <defaults>
</compile_context>

<pallas_src>
import functools

import jax
import jax.numpy as jnp
from jax.experimental import pallas as pl
from jax.experimental.pallas import tpu as pltpu


def _dvae_loss_kernel(logprobs_ref, targets_ref,
                      post_mu_ref, post_lv_ref,
                      vox_mu_ref, vox_lv_ref,
                      img_mu_ref, img_lv_ref,
                      out_ref,
                      *, batch, tile_rows, shift, ragged):
    i = pl.program_id(0)

    def partials(row_mask):
        # ---- CrossEntropyLoss partial sums (per tile) -----------------------
        lp = logprobs_ref[...].astype(jnp.float32)                 # (TB, C)
        tg = targets_ref[...].astype(jnp.float32)                  # (TB, C)

        if shift > 0.0:   # static (Python) branch; only 'None'/'Const' reach here
            st = tg + jnp.float32(shift)
            rowsum = jnp.sum(st, axis=1, keepdims=True)            # (TB, 1)
            if row_mask is not None:
                rowsum = jnp.where(row_mask, rowsum, jnp.float32(1.0))
            # one exact divide per row, then C multiplies (full precision)
            st = st * (jnp.float32(1.0) / rowsum)
        else:
            st = tg

        cel_rows = -jnp.sum(st * lp, axis=1, keepdims=True)        # (TB, 1)

        # ---- KL divergences (mu1 and mu2 both given) ------------------------
        pmu = post_mu_ref[...].astype(jnp.float32)                 # (TB, D)
        plv = post_lv_ref[...].astype(jnp.float32)
        exp_plv = jnp.exp(plv)            # hoisted: shared by both KL terms

        def kld_rows(mu2_ref, lv2_ref):
            mu2 = mu2_ref[...].astype(jnp.float32)
            lv2 = lv2_ref[...].astype(jnp.float32)
            inv_var2 = jnp.exp(-lv2)      # multiply instead of divide
            term = 1.0 + plv - lv2 - (exp_plv + (pmu - mu2) ** 2) * inv_var2
            return jnp.sum(term, axis=1, keepdims=True)            # (TB, 1)

        kldv_rows = kld_rows(vox_mu_ref, vox_lv_ref)
        kldi_rows = kld_rows(img_mu_ref, img_lv_ref)

        if row_mask is not None:
            zero = jnp.float32(0.0)
            cel_rows = jnp.where(row_mask, cel_rows, zero)
            kldv_rows = jnp.where(row_mask, kldv_rows, zero)
            kldi_rows = jnp.where(row_mask, kldi_rows, zero)

        return jnp.sum(cel_rows), jnp.sum(kldv_rows), jnp.sum(kldi_rows)

    def write(cel_p, kldv_p, kldi_p):
        # Lane-dense (8, 128) output block; partials live in row 0, lanes 0..2.
        sub = jax.lax.broadcasted_iota(jnp.int32, (8, 128), 0)
        lane = jax.lax.broadcasted_iota(jnp.int32, (8, 128), 1)
        first = sub == 0
        out_ref[...] = (jnp.where(first & (lane == 0), cel_p, jnp.float32(0.0))
                        + jnp.where(first & (lane == 1), kldv_p, jnp.float32(0.0))
                        + jnp.where(first & (lane == 2), kldi_p, jnp.float32(0.0)))

    if not ragged:
        # Fast path: every tile is fully inside the batch, no masking anywhere.
        write(*partials(None))
    else:
        last = pl.num_programs(0) - 1

        @pl.when(i < last)
        def _():
            write(*partials(None))

        @pl.when(i == last)
        def _():
            row_ids = (jax.lax.broadcasted_iota(jnp.int32, (tile_rows, 1), 0)
                       + i * tile_rows)
            write(*partials(row_ids < batch))


# Row-tile cap: bounded further by the per-generation VMEM budget below.
_MAX_TILE_ROWS = 8192
# Most conservative physical VMEM across supported generations (v7x, per TC).
_DEFAULT_VMEM_CAPACITY = 64 * 1024 * 1024


def _vmem_capacity_bytes():
    try:
        cap = int(pltpu.get_tpu_info().vmem_capacity_bytes)
        if cap > 0:
            return cap
    except Exception:
        pass
    return _DEFAULT_VMEM_CAPACITY


def _pick_tiling(batch, args):
    """Returns (tile_rows, vmem_limit_bytes) sized from the chip's VMEM."""
    cap = _vmem_capacity_bytes()
    # ~5/8 of VMEM for the double-buffered input tiles, ~1/8 headroom for the
    # (tiny) output blocks + compiler internal scratch below the 7/8 limit.
    input_budget = (cap * 5) // 8
    vmem_limit = (cap * 7) // 8

    # bytes per batch row across all 8 inputs, double buffered
    per_row = 2 * sum(a.shape[1] * a.dtype.itemsize for a in args)
    tb = input_budget // max(per_row, 1)
    tb = max(8, min(_MAX_TILE_ROWS, (tb // 8) * 8))
    if tb >= batch:
        tb = batch            # single full-batch tile (full dims are always legal)
    return tb, vmem_limit


def dvae_loss(inputs, targets, *,
              kl_weight=1.0, kl_ratio=0.5,
              label_smoothing_mode='Const', label_smoothing_rate=0.1,
              tile_rows=None):
    """Returns (total, CEL, KLDV, KLDI) as float32 scalars."""
    if label_smoothing_mode == 'None':
        shift = 0.0
    elif label_smoothing_mode == 'Const':
        shift = float(label_smoothing_rate / (1.0 - 2.0 * label_smoothing_rate))
    else:
        # TODO(synk): 'Random' smoothing uses torch.randn_like; would require
        # pltpu.prng_seed/prng_random_bits -- fail loudly instead of diverging.
        raise NotImplementedError(
            f"label_smoothing_mode={label_smoothing_mode!r} is not supported")

    logprobs = inputs['logprobs']
    B, C = logprobs.shape
    D = inputs['vox_posterior_mus'].shape[1]

    args = (logprobs, targets,
            inputs['vox_posterior_mus'], inputs['vox_posterior_logvars'],
            inputs['vox_prior_mus'], inputs['vox_prior_logvars'],
            inputs['img_prior_mus'], inputs['img_prior_logvars'])

    auto_tb, vmem_limit = _pick_tiling(B, args)
    tb = auto_tb if tile_rows is None else int(tile_rows)
    if tb != B and tb % 8 != 0:
        raise ValueError("tile_rows must be a multiple of 8 or equal the batch size")
    num_tiles = pl.cdiv(B, tb)
    ragged = (B % tb) != 0

    kernel = functools.partial(_dvae_loss_kernel,
                               batch=B, tile_rows=tb, shift=shift, ragged=ragged)

    spec_c = pl.BlockSpec((tb, C), lambda i: (i, 0))
    spec_d = pl.BlockSpec((tb, D), lambda i: (i, 0))
    in_specs = [spec_c, spec_c, spec_d, spec_d, spec_d, spec_d, spec_d, spec_d]

    out_rows = num_tiles * 8
    bytes_accessed = int(sum(a.size * a.dtype.itemsize for a in args)
                         + out_rows * 128 * 4)
    cost = pl.CostEstimate(flops=int(5 * B * C + 14 * B * D),
                           transcendentals=int(3 * B * D),
                           bytes_accessed=bytes_accessed)

    partials = pl.pallas_call(
        kernel,
        out_shape=jax.ShapeDtypeStruct((out_rows, 128), jnp.float32),
        grid=(num_tiles,),
        in_specs=in_specs,
        out_specs=pl.BlockSpec((8, 128), lambda i: (i, 0)),
        compiler_params=pltpu.CompilerParams(
            dimension_semantics=("parallel",),   # batch axis shardable across TCs (v7x)
            vmem_limit_bytes=int(vmem_limit)),
        cost_estimate=cost,
    )(*args)

    # Tiny final combine in JAX: tree-sum the per-tile partials, then apply
    # 1/B, the -0.5 KL factor, and the kl weights.
    sums = jnp.sum(partials, axis=0)             # lanes 3..127 are exact zeros
    inv_b = jnp.float32(1.0 / B)
    cel = sums[0] * inv_b
    kldv = jnp.float32(-0.5) * sums[1] * inv_b
    kldi = jnp.float32(-0.5) * sums[2] * inv_b
    total = cel + jnp.float32(kl_weight) * (jnp.float32(kl_ratio) * kldv
                                            + jnp.float32(1.0 - kl_ratio) * kldi)
    return total, cel, kldv, kldi


def _reference(inputs, targets, *, kl_weight, kl_ratio,
               label_smoothing_mode, label_smoothing_rate):
    lp = inputs['logprobs'].astype(jnp.float32)
    tg = targets.astype(jnp.float32)
    if label_smoothing_mode == 'None':
        shift = 0.0
    else:
        shift = label_smoothing_rate / (1.0 - 2.0 * label_smoothing_rate)
    if shift > 0.0:
        st = tg + shift
        st = st / jnp.sum(st, axis=1, keepdims=True)
    else:
        st = tg
    cel = -jnp.sum(st * lp) / lp.shape[0]

    def kld(mu1, lv1, mu2, lv2):
        mu1, lv1, mu2, lv2 = (x.astype(jnp.float32) for x in (mu1, lv1, mu2, lv2))
        t = 1.0 + lv1 - lv2 - (jnp.exp(lv1) + (mu1 - mu2) ** 2) / jnp.exp(lv2)
        return -0.5 * jnp.mean(jnp.sum(t, axis=1))

    kldv = kld(inputs['vox_posterior_mus'], inputs['vox_posterior_logvars'],
               inputs['vox_prior_mus'], inputs['vox_prior_logvars'])
    kldi = kld(inputs['vox_posterior_mus'], inputs['vox_posterior_logvars'],
               inputs['img_prior_mus'], inputs['img_prior_logvars'])
    total = cel + kl_weight * (kl_ratio * kldv + (1.0 - kl_ratio) * kldi)
    return total, cel, kldv, kldi


if __name__ == "__main__":
    key = jax.random.PRNGKey(0)
    B, C, D = 20, 128, 64   # batch, num classes, latent dim (B not a multiple of 8)
    ks = jax.random.split(key, 8)

    logits = jax.random.normal(ks[0], (B, C), jnp.float32)
    logprobs = jax.nn.log_softmax(logits, axis=1)
    targets = jax.nn.softmax(4.0 * jax.random.normal(ks[1], (B, C), jnp.float32), axis=1)

    inputs = {
        'logprobs': logprobs,
        'vox_posterior_mus':      0.5 * jax.random.normal(ks[2], (B, D), jnp.float32),
        'vox_posterior_logvars':  0.3 * jax.random.normal(ks[3], (B, D), jnp.float32),
        'vox_prior_mus':          0.5 * jax.random.normal(ks[4], (B, D), jnp.float32),
        'vox_prior_logvars':      0.3 * jax.random.normal(ks[5], (B, D), jnp.float32),
        'img_prior_mus':          0.5 * jax.random.normal(ks[6], (B, D), jnp.float32),
        'img_prior_logvars':      0.3 * jax.random.normal(ks[7], (B, D), jnp.float32),
    }

    cfg = dict(kl_weight=0.25, kl_ratio=0.7,
               label_smoothing_mode='Const', label_smoothing_rate=0.1)

    r_total, r_cel, r_kldv, r_kldi = _reference(inputs, targets, **cfg)

    # 1) auto tile size (single full-batch tile here)
    total, cel, kldv, kldi = dvae_loss(inputs, targets, **cfg)
    jax.block_until_ready(total)
    assert jnp.allclose(total, r_total, rtol=1e-5, atol=1e-5)
    assert jnp.allclose(cel,   r_cel,   rtol=1e-5, atol=1e-5)
    assert jnp.allclose(kldv,  r_kldv,  rtol=1e-5, atol=1e-5)
    assert jnp.allclose(kldi,  r_kldi,  rtol=1e-5, atol=1e-5)

    # 2) forced small tile: 3 parallel grid steps with a ragged (masked) last tile
    total2, cel2, kldv2, kldi2 = dvae_loss(inputs, targets, tile_rows=8, **cfg)
    jax.block_until_ready(total2)
    assert jnp.allclose(total2, r_total, rtol=1e-5, atol=1e-5)
    assert jnp.allclose(cel2,   r_cel,   rtol=1e-5, atol=1e-5)
    assert jnp.allclose(kldv2,  r_kldv,  rtol=1e-5, atol=1e-5)
    assert jnp.allclose(kldi2,  r_kldi,  rtol=1e-5, atol=1e-5)

    # 3) bf16 HBM inputs (halves HBM bytes; kernel upcasts to f32 per tile)
    inputs_bf = {k: v.astype(jnp.bfloat16) for k, v in inputs.items()}
    targets_bf = targets.astype(jnp.bfloat16)
    rb_total, rb_cel, rb_kldv, rb_kldi = _reference(inputs_bf, targets_bf, **cfg)
    total3, cel3, kldv3, kldi3 = dvae_loss(inputs_bf, targets_bf, **cfg)
    jax.block_until_ready(total3)
    assert jnp.allclose(total3, rb_total, rtol=1e-4, atol=1e-4)
    assert jnp.allclose(cel3,   rb_cel,   rtol=1e-4, atol=1e-4)
    assert jnp.allclose(kldv3,  rb_kldv,  rtol=1e-4, atol=1e-4)
    assert jnp.allclose(kldi3,  rb_kldi,  rtol=1e-4, atol=1e-4)

    print("KERNEL_OK")
</pallas_src>

<mosaic_0001>
module attributes {stable_mosaic.version = 11 : i64} {
  func.func @_dvae_loss_kernel(%arg0: i32, %arg1: memref<20x128xf32, #tpu.memory_space<vmem>>, %arg2: memref<20x128xf32, #tpu.memory_space<vmem>>, %arg3: memref<20x64xf32, #tpu.memory_space<vmem>>, %arg4: memref<20x64xf32, #tpu.memory_space<vmem>>, %arg5: memref<20x64xf32, #tpu.memory_space<vmem>>, %arg6: memref<20x64xf32, #tpu.memory_space<vmem>>, %arg7: memref<20x64xf32, #tpu.memory_space<vmem>>, %arg8: memref<20x64xf32, #tpu.memory_space<vmem>>, %arg9: memref<8x128xf32, #tpu.memory_space<vmem>>) attributes {dimension_semantics = [#tpu.dimension_semantics<parallel>], iteration_bounds = array<i64: 1>, scalar_prefetch = 0 : i64, scratch_operands = 0 : i64, tpu.core_type = #tpu.core_type<tc>, window_params = [{transform_indices = @transform_0, window_bounds = array<i64: 20, 128>}, {transform_indices = @transform_1, window_bounds = array<i64: 20, 128>}, {transform_indices = @transform_2, window_bounds = array<i64: 20, 64>}, {transform_indices = @transform_3, window_bounds = array<i64: 20, 64>}, {transform_indices = @transform_4, window_bounds = array<i64: 20, 64>}, {transform_indices = @transform_5, window_bounds = array<i64: 20, 64>}, {transform_indices = @transform_6, window_bounds = array<i64: 20, 64>}, {transform_indices = @transform_7, window_bounds = array<i64: 20, 64>}, {transform_indices = @transform_8, window_bounds = array<i64: 8, 128>}]} {
    %c0 = arith.constant 0 : index
    %c0_0 = arith.constant 0 : index
    %0 = vector.load %arg1[%c0, %c0_0] : memref<20x128xf32, #tpu.memory_space<vmem>>, vector<20x128xf32>
    %c0_1 = arith.constant 0 : index
    %c0_2 = arith.constant 0 : index
    %1 = vector.load %arg2[%c0_1, %c0_2] : memref<20x128xf32, #tpu.memory_space<vmem>>, vector<20x128xf32>
    %cst = arith.constant 1.250000e-01 : f32
    %2 = vector.broadcast %cst : f32 to vector<20x128xf32>
    %3 = arith.addf %1, %2 : vector<20x128xf32>
    %cst_3 = arith.constant dense<0.000000e+00> : vector<20xf32>
    %4 = vector.multi_reduction <add>, %3, %cst_3 [1] : vector<20x128xf32> to vector<20xf32>
    %5 = vector.shape_cast %4 : vector<20xf32> to vector<20x1xf32>
    %cst_4 = arith.constant 1.000000e+00 : f32
    %6 = vector.broadcast %cst_4 : f32 to vector<20x1xf32>
    %7 = arith.divf %6, %5 : vector<20x1xf32>
    %8 = vector.broadcast %7 : vector<20x1xf32> to vector<20x128xf32>
    %9 = arith.mulf %3, %8 : vector<20x128xf32>
    %10 = arith.mulf %9, %0 : vector<20x128xf32>
    %cst_5 = arith.constant dense<0.000000e+00> : vector<20xf32>
    %11 = vector.multi_reduction <add>, %10, %cst_5 [1] : vector<20x128xf32> to vector<20xf32>
    %12 = vector.shape_cast %11 : vector<20xf32> to vector<20x1xf32>
    %cst_6 = arith.constant 0.000000e+00 : f32
    %13 = vector.broadcast %cst_6 : f32 to vector<20x1xf32>
    %14 = arith.subf %13, %12 : vector<20x1xf32>
    %c0_7 = arith.constant 0 : index
    %c0_8 = arith.constant 0 : index
    %15 = vector.load %arg3[%c0_7, %c0_8] : memref<20x64xf32, #tpu.memory_space<vmem>>, vector<20x64xf32>
    %c0_9 = arith.constant 0 : index
    %c0_10 = arith.constant 0 : index
    %16 = vector.load %arg4[%c0_9, %c0_10] : memref<20x64xf32, #tpu.memory_space<vmem>>, vector<20x64xf32>
    %17 = math.exp %16 : vector<20x64xf32>
    %c0_11 = arith.constant 0 : index
    %c0_12 = arith.constant 0 : index
    %18 = vector.load %arg5[%c0_11, %c0_12] : memref<20x64xf32, #tpu.memory_space<vmem>>, vector<20x64xf32>
    %c0_13 = arith.constant 0 : index
    %c0_14 = arith.constant 0 : index
    %19 = vector.load %arg6[%c0_13, %c0_14] : memref<20x64xf32, #tpu.memory_space<vmem>>, vector<20x64xf32>
    %cst_15 = arith.constant 0.000000e+00 : f32
    %20 = vector.broadcast %cst_15 : f32 to vector<20x64xf32>
    %21 = arith.subf %20, %19 : vector<20x64xf32>
    %22 = math.exp %21 : vector<20x64xf32>
    %cst_16 = arith.constant 1.000000e+00 : f32
    %23 = vector.broadcast %cst_16 : f32 to vector<20x64xf32>
    %24 = arith.addf %23, %16 : vector<20x64xf32>
    %25 = arith.subf %24, %19 : vector<20x64xf32>
    %26 = arith.subf %15, %18 : vector<20x64xf32>
    %27 = arith.mulf %26, %26 : vector<20x64xf32>
    %28 = arith.addf %17, %27 : vector<20x64xf32>
    %29 = arith.mulf %28, %22 : vector<20x64xf32>
    %30 = arith.subf %25, %29 : vector<20x64xf32>
    %cst_17 = arith.constant dense<0.000000e+00> : vector<20xf32>
    %31 = vector.multi_reduction <add>, %30, %cst_17 [1] : vector<20x64xf32> to vector<20xf32>
    %32 = vector.shape_cast %31 : vector<20xf32> to vector<20x1xf32>
    %c0_18 = arith.constant 0 : index
    %c0_19 = arith.constant 0 : index
    %33 = vector.load %arg7[%c0_18, %c0_19] : memref<20x64xf32, #tpu.memory_space<vmem>>, vector<20x64xf32>
    %c0_20 = arith.constant 0 : index
    %c0_21 = arith.constant 0 : index
    %34 = vector.load %arg8[%c0_20, %c0_21] : memref<20x64xf32, #tpu.memory_space<vmem>>, vector<20x64xf32>
    %cst_22 = arith.constant 0.000000e+00 : f32
    %35 = vector.broadcast %cst_22 : f32 to vector<20x64xf32>
    %36 = arith.subf %35, %34 : vector<20x64xf32>
    %37 = math.exp %36 : vector<20x64xf32>
    %cst_23 = arith.constant 1.000000e+00 : f32
    %38 = vector.broadcast %cst_23 : f32 to vector<20x64xf32>
    %39 = arith.addf %38, %16 : vector<20x64xf32>
    %40 = arith.subf %39, %34 : vector<20x64xf32>
    %41 = arith.subf %15, %33 : vector<20x64xf32>
    %42 = arith.mulf %41, %41 : vector<20x64xf32>
    %43 = arith.addf %17, %42 : vector<20x64xf32>
    %44 = arith.mulf %43, %37 : vector<20x64xf32>
    %45 = arith.subf %40, %44 : vector<20x64xf32>
    %cst_24 = arith.constant dense<0.000000e+00> : vector<20xf32>
    %46 = vector.multi_reduction <add>, %45, %cst_24 [1] : vector<20x64xf32> to vector<20xf32>
    %47 = vector.shape_cast %46 : vector<20xf32> to vector<20x1xf32>
    %48 = vector.shape_cast %14 : vector<20x1xf32> to vector<1x20x1xf32>
    %cst_25 = arith.constant dense<0.000000e+00> : vector<1xf32>
    %49 = vector.multi_reduction <add>, %48, %cst_25 [1, 2] : vector<1x20x1xf32> to vector<1xf32>
    %50 = vector.shape_cast %49 : vector<1xf32> to vector<1x1x1xf32>
    %51 = vector.extract %50[0, 0, 0] : f32 from vector<1x1x1xf32>
    %52 = vector.shape_cast %32 : vector<20x1xf32> to vector<1x20x1xf32>
    %cst_26 = arith.constant dense<0.000000e+00> : vector<1xf32>
    %53 = vector.multi_reduction <add>, %52, %cst_26 [1, 2] : vector<1x20x1xf32> to vector<1xf32>
    %54 = vector.shape_cast %53 : vector<1xf32> to vector<1x1x1xf32>
    %55 = vector.extract %54[0, 0, 0] : f32 from vector<1x1x1xf32>
    %56 = vector.shape_cast %47 : vector<20x1xf32> to vector<1x20x1xf32>
    %cst_27 = arith.constant dense<0.000000e+00> : vector<1xf32>
    %57 = vector.multi_reduction <add>, %56, %cst_27 [1, 2] : vector<1x20x1xf32> to vector<1xf32>
    %58 = vector.shape_cast %57 : vector<1xf32> to vector<1x1x1xf32>
    %59 = vector.extract %58[0, 0, 0] : f32 from vector<1x1x1xf32>
    %60 = tpu.iota {dimensions = array<i32: 0>} : vector<8x128xi32>
    %61 = tpu.iota {dimensions = array<i32: 1>} : vector<8x128xi32>
    %c0_i32 = arith.constant 0 : i32
    %62 = vector.broadcast %c0_i32 : i32 to vector<8x128xi32>
    %63 = arith.cmpi eq, %60, %62 : vector<8x128xi32>
    %c0_i32_28 = arith.constant 0 : i32
    %64 = vector.broadcast %c0_i32_28 : i32 to vector<8x128xi32>
    %65 = arith.cmpi eq, %61, %64 : vector<8x128xi32>
    %66 = arith.andi %63, %65 : vector<8x128xi1>
    %cst_29 = arith.constant 0.000000e+00 : f32
    %67 = vector.broadcast %51 : f32 to vector<8x128xf32>
    %68 = vector.broadcast %cst_29 : f32 to vector<8x128xf32>
    %69 = arith.select %66, %67, %68 : vector<8x128xi1>, vector<8x128xf32>
    %c1_i32 = arith.constant 1 : i32
    %70 = vector.broadcast %c1_i32 : i32 to vector<8x128xi32>
    %71 = arith.cmpi eq, %61, %70 : vector<8x128xi32>
    %72 = arith.andi %63, %71 : vector<8x128xi1>
    %cst_30 = arith.constant 0.000000e+00 : f32
    %73 = vector.broadcast %55 : f32 to vector<8x128xf32>
    %74 = vector.broadcast %cst_30 : f32 to vector<8x128xf32>
    %75 = arith.select %72, %73, %74 : vector<8x128xi1>, vector<8x128xf32>
    %76 = arith.addf %69, %75 : vector<8x128xf32>
    %c2_i32 = arith.constant 2 : i32
    %77 = vector.broadcast %c2_i32 : i32 to vector<8x128xi32>
    %78 = arith.cmpi eq, %61, %77 : vector<8x128xi32>
    %79 = arith.andi %63, %78 : vector<8x128xi1>
    %cst_31 = arith.constant 0.000000e+00 : f32
    %80 = vector.broadcast %59 : f32 to vector<8x128xf32>
    %81 = vector.broadcast %cst_31 : f32 to vector<8x128xf32>
    %82 = arith.select %79, %80, %81 : vector<8x128xi1>, vector<8x128xf32>
    %83 = arith.addf %76, %82 : vector<8x128xf32>
    %c0_32 = arith.constant 0 : index
    %c0_33 = arith.constant 0 : index
    %84 = vector.load %arg9[%c0_32, %c0_33] : memref<8x128xf32, #tpu.memory_space<vmem>>, vector<8x128xf32>
    tpu.vector_store %arg9[%c0_32, %c0_33], %83 {strides = array<i32>} : memref<8x128xf32, #tpu.memory_space<vmem>>, vector<8x128xf32>,
    return
  }
  func.func @transform_0(%arg0: i32) -> (i32, i32) {
    %c0_i32 = arith.constant 0 : i32
    %c0_i32_0 = arith.constant 0 : i32
    return %arg0, %c0_i32 : i32, i32
  }
  func.func @transform_1(%arg0: i32) -> (i32, i32) {
    %c0_i32 = arith.constant 0 : i32
    %c0_i32_0 = arith.constant 0 : i32
    return %arg0, %c0_i32 : i32, i32
  }
  func.func @transform_2(%arg0: i32) -> (i32, i32) {
    %c0_i32 = arith.constant 0 : i32
    %c0_i32_0 = arith.constant 0 : i32
    return %arg0, %c0_i32 : i32, i32
  }
  func.func @transform_3(%arg0: i32) -> (i32, i32) {
    %c0_i32 = arith.constant 0 : i32
    %c0_i32_0 = arith.constant 0 : i32
    return %arg0, %c0_i32 : i32, i32
  }
  func.func @transform_4(%arg0: i32) -> (i32, i32) {
    %c0_i32 = arith.constant 0 : i32
    %c0_i32_0 = arith.constant 0 : i32
    return %arg0, %c0_i32 : i32, i32
  }
  func.func @transform_5(%arg0: i32) -> (i32, i32) {
    %c0_i32 = arith.constant 0 : i32
    %c0_i32_0 = arith.constant 0 : i32
    return %arg0, %c0_i32 : i32, i32
  }
  func.func @transform_6(%arg0: i32) -> (i32, i32) {
    %c0_i32 = arith.constant 0 : i32
    %c0_i32_0 = arith.constant 0 : i32
    return %arg0, %c0_i32 : i32, i32
  }
  func.func @transform_7(%arg0: i32) -> (i32, i32) {
    %c0_i32 = arith.constant 0 : i32
    %c0_i32_0 = arith.constant 0 : i32
    return %arg0, %c0_i32 : i32, i32
  }
  func.func @transform_8(%arg0: i32) -> (i32, i32) {
    %c0_i32 = arith.constant 0 : i32
    %c0_i32_0 = arith.constant 0 : i32
    return %arg0, %c0_i32 : i32, i32
  }
}

</mosaic_0001>

<llo_original>
// kernel: tpu_custom_call.1
$region0: #{tpu_custom_call.1}
  #allocation0 [shape = 'u32[]', space=smem, size = 0x4, offset = 0x4, fixed_abs, tag = 'smem constant byte address 0x4 - core index']
  #allocation1 [shape = 'u32[144,128]{1,0:T(1,128)}', space=vmem, size = 0x12000, scoped, tag = 'internal scratch']
  %s0 = inlined_call_operand.hbm [shape: f32[20,128], index: 0, kind: input, shape index: {}]
  %s1 = inlined_call_operand.hbm [shape: f32[20,128], index: 1, kind: input, shape index: {}]
  %s2 = inlined_call_operand.hbm [shape: f32[20,64], index: 2, kind: input, shape index: {}]
  %s3 = inlined_call_operand.hbm [shape: f32[20,64], index: 3, kind: input, shape index: {}]
  %s4 = inlined_call_operand.hbm [shape: f32[20,64], index: 4, kind: input, shape index: {}]
  %s5 = inlined_call_operand.hbm [shape: f32[20,64], index: 5, kind: input, shape index: {}]
  %s6 = inlined_call_operand.hbm [shape: f32[20,64], index: 6, kind: input, shape index: {}]
  %s7 = inlined_call_operand.hbm [shape: f32[20,64], index: 7, kind: input, shape index: {}]
  %s8 = inlined_call_operand.hbm [shape: f32[8,128], index: 8, kind: output, shape index: {}]
  %s9 = sld [smem:[#allocation0]]
  $region74: #{tpu_custom_call.1} parent=0
    _
  %s11 = ssub.s32 1, %s9
  %s12 = scalar_select 0, %s11, %s9
  $region1: #{tpu_custom_call.1} parent=0
    #allocation2 [shape = 'u8[12288]{0}', space=vmem, size = 0x3000, scoped, tag = 'input window, operand 0, single buffered']
    #allocation3 [shape = 's32[1]{0}', space=sflag, size = 0x4, scoped, tag = 'scoped memory for tpu_custom_call.1']
    #allocation4 [shape = 's32[1]{0}', space=sflag, size = 0x4, scoped, tag = 'scoped memory for tpu_custom_call.1']
    #allocation5 [shape = 'u8[12288]{0}', space=vmem, size = 0x3000, scoped, tag = 'input window, operand 1, single buffered']
    #allocation6 [shape = 's32[1]{0}', space=sflag, size = 0x4, scoped, tag = 'scoped memory for tpu_custom_call.1']
    #allocation7 [shape = 'u8[12288]{0}', space=vmem, size = 0x3000, scoped, tag = 'input window, operand 2, single buffered']
    #allocation8 [shape = 'u8[12288]{0}', space=vmem, size = 0x3000, scoped, tag = 'input window, operand 3, single buffered']
    #allocation9 [shape = 's32[1]{0}', space=sflag, size = 0x4, scoped, tag = 'scoped memory for tpu_custom_call.1']
    #allocation10 [shape = 'u8[12288]{0}', space=vmem, size = 0x3000, scoped, tag = 'input window, operand 4, single buffered']
    #allocation11 [shape = 'u8[12288]{0}', space=vmem, size = 0x3000, scoped, tag = 'input window, operand 5, single buffered']
    #allocation12 [shape = 's32[1]{0}', space=sflag, size = 0x4, scoped, tag = 'scoped memory for tpu_custom_call.1']
    #allocation13 [shape = 'u8[12288]{0}', space=vmem, size = 0x3000, scoped, tag = 'input window, operand 6, single buffered']
    #allocation14 [shape = 'u8[12288]{0}', space=vmem, size = 0x3000, scoped, tag = 'input window, operand 7, single buffered']
    #allocation15 [shape = 's32[1]{0}', space=sflag, size = 0x4, scoped, tag = 'scoped memory for tpu_custom_call.1']
    #allocation16 [shape = 'u8[4096]{0}', space=vmem, size = 0x1000, scoped, tag = 'output window, operand 0, single buffered']
    %13 = vsyncpa [#allocation3], 0
    %14 = vsyncpa [#allocation6], 0
    %15 = vsyncpa [#allocation9], 0
    %16 = vsyncpa [#allocation12], 0
    %17 = vsyncpa [#allocation15], 0
    %18 = vsyncpa [#allocation4], 0
    // Predicated region
    $region2: #{tpu_custom_call.1} parent=1 // pred_check
      _
    $region3: #{tpu_custom_call.1} parent=1 // pred_check_branch
      %20 = sbr.rel (0) target = $region5
    $region4: #{tpu_custom_call.1} parent=1 // pred_region
      %s22 = ssub.s32 384, 384
      %23 = vsyncadd [#allocation3], %s22
      %s24 = sshll.u32 [#allocation2], 4
      %s25 = int_to_ptr.vmem [resolvable:$true] %s24
      %30 = dma.hbm_to_vmem [thread:$0]  %s0, 384, %s25, [#allocation3], 128, 128, 8
    $region5: #{tpu_custom_call.1} parent=1 // pred_fallthru
      _
    // Predicated region
    $region6: #{tpu_custom_call.1} parent=1 // pred_check
      _
    $region7: #{tpu_custom_call.1} parent=1 // pred_check_branch
      %32 = sbr.rel (0) target = $region9
    $region8: #{tpu_custom_call.1} parent=1 // pred_region
      %s34 = ssub.s32 384, 384
      %35 = vsyncadd [#allocation6], %s34
      %s36 = sshll.u32 [#allocation5], 4
      %s37 = int_to_ptr.vmem [resolvable:$true] %s36
      %42 = dma.hbm_to_vmem [thread:$0]  %s1, 384, %s37, [#allocation6], 128, 128, 8
    $region9: #{tpu_custom_call.1} parent=1 // pred_fallthru
      _
    // Predicated region
    $region10: #{tpu_custom_call.1} parent=1 // pred_check
      _
    $region11: #{tpu_custom_call.1} parent=1 // pred_check_branch
      %44 = sbr.rel (0) target = $region13
    $region12: #{tpu_custom_call.1} parent=1 // pred_region
      %s46 = ssub.s32 384, 384
      %47 = vsyncadd [#allocation6], %s46
      %s48 = sshll.u32 [#allocation7], 4
      %s49 = int_to_ptr.vmem [resolvable:$true] %s48
      %54 = dma.hbm_to_vmem [thread:$0]  %s2, 384, %s49, [#allocation6], 128, 128, 8
    $region13: #{tpu_custom_call.1} parent=1 // pred_fallthru
      _
    // Predicated region
    $region14: #{tpu_custom_call.1} parent=1 // pred_check
      _
    $region15: #{tpu_custom_call.1} parent=1 // pred_check_branch
      %56 = sbr.rel (0) target = $region17
    $region16: #{tpu_custom_call.1} parent=1 // pred_region
      %s58 = ssub.s32 384, 384
      %59 = vsyncadd [#allocation9], %s58
      %s60 = sshll.u32 [#allocation8], 4
      %s61 = int_to_ptr.vmem [resolvable:$true] %s60
      %66 = dma.hbm_to_vmem [thread:$0]  %s3, 384, %s61, [#allocation9], 128, 128, 8
    $region17: #{tpu_custom_call.1} parent=1 // pred_fallthru
      _
    // Predicated region
    $region18: #{tpu_custom_call.1} parent=1 // pred_check
      _
    $region19: #{tpu_custom_call.1} parent=1 // pred_check_branch
      %68 = sbr.rel (0) target = $region21
    $region20: #{tpu_custom_call.1} parent=1 // pred_region
      %s70 = ssub.s32 384, 384
      %71 = vsyncadd [#allocation9], %s70
      %s72 = sshll.u32 [#allocation10], 4
      %s73 = int_to_ptr.vmem [resolvable:$true] %s72
      %78 = dma.hbm_to_vmem [thread:$0]  %s4, 384, %s73, [#allocation9], 128, 128, 8
    $region21: #{tpu_custom_call.1} parent=1 // pred_fallthru
      _
    // Predicated region
    $region22: #{tpu_custom_call.1} parent=1 // pred_check
      _
    $region23: #{tpu_custom_call.1} parent=1 // pred_check_branch
      %80 = sbr.rel (0) target = $region25
    $region24: #{tpu_custom_call.1} parent=1 // pred_region
      %s82 = ssub.s32 384, 384
      %83 = vsyncadd [#allocation12], %s82
      %s84 = sshll.u32 [#allocation11], 4
      %s85 = int_to_ptr.vmem [resolvable:$true] %s84
      %90 = dma.hbm_to_vmem [thread:$0]  %s5, 384, %s85, [#allocation12], 128, 128, 8
    $region25: #{tpu_custom_call.1} parent=1 // pred_fallthru
      _
    // Predicated region
    $region26: #{tpu_custom_call.1} parent=1 // pred_check
      _
    $region27: #{tpu_custom_call.1} parent=1 // pred_check_branch
      %92 = sbr.rel (0) target = $region29
    $region28: #{tpu_custom_call.1} parent=1 // pred_region
      %s94 = ssub.s32 384, 384
      %95 = vsyncadd [#allocation12], %s94
      %s96 = sshll.u32 [#allocation13], 4
      %s97 = int_to_ptr.vmem [resolvable:$true] %s96
      %102 = dma.hbm_to_vmem [thread:$0]  %s6, 384, %s97, [#allocation12], 128, 128, 8
    $region29: #{tpu_custom_call.1} parent=1 // pred_fallthru
      _
    // Predicated region
    $region30: #{tpu_custom_call.1} parent=1 // pred_check
      _
    $region31: #{tpu_custom_call.1} parent=1 // pred_check_branch
      %104 = sbr.rel (0) target = $region33
    $region32: #{tpu_custom_call.1} parent=1 // pred_region
      %s106 = ssub.s32 384, 384
      %107 = vsyncadd [#allocation15], %s106
      %s108 = sshll.u32 [#allocation14], 4
      %s109 = int_to_ptr.vmem [resolvable:$true] %s108
      %114 = dma.hbm_to_vmem [thread:$0]  %s7, 384, %s109, [#allocation15], 128, 128, 8
    $region33: #{tpu_custom_call.1} parent=1 // pred_fallthru
      _
    // Predicated region
    $region34: #{tpu_custom_call.1} parent=1 // pred_check
      _
    $region35: #{tpu_custom_call.1} parent=1 // pred_check_branch
      %116 = sbr.rel (0) target = $region37
    $region36: #{tpu_custom_call.1} parent=1 // pred_region
      %117 = dma.done [#allocation3], 384
    $region37: #{tpu_custom_call.1} parent=1 // pred_fallthru
      _
    // Predicated region
    $region38: #{tpu_custom_call.1} parent=1 // pred_check
      _
    $region39: #{tpu_custom_call.1} parent=1 // pred_check_branch
      %119 = sbr.rel (0) target = $region41
    $region40: #{tpu_custom_call.1} parent=1 // pred_region
      %120 = dma.done [#allocation6], 384
    $region41: #{tpu_custom_call.1} parent=1 // pred_fallthru
      _
    // Predicated region
    $region42: #{tpu_custom_call.1} parent=1 // pred_check
      _
    $region43: #{tpu_custom_call.1} parent=1 // pred_check_branch
      %122 = sbr.rel (0) target = $region45
    $region44: #{tpu_custom_call.1} parent=1 // pred_region
      %123 = dma.done [#allocation6], 384
    $region45: #{tpu_custom_call.1} parent=1 // pred_fallthru
      _
    // Predicated region
    $region46: #{tpu_custom_call.1} parent=1 // pred_check
      _
    $region47: #{tpu_custom_call.1} parent=1 // pred_check_branch
      %125 = sbr.rel (0) target = $region49
    $region48: #{tpu_custom_call.1} parent=1 // pred_region
      %126 = dma.done [#allocation9], 384
    $region49: #{tpu_custom_call.1} parent=1 // pred_fallthru
      _
    // Predicated region
    $region50: #{tpu_custom_call.1} parent=1 // pred_check
      _
    $region51: #{tpu_custom_call.1} parent=1 // pred_check_branch
      %128 = sbr.rel (0) target = $region53
    $region52: #{tpu_custom_call.1} parent=1 // pred_region
      %129 = dma.done [#allocation9], 384
    $region53: #{tpu_custom_call.1} parent=1 // pred_fallthru
      _
    // Predicated region
    $region54: #{tpu_custom_call.1} parent=1 // pred_check
      _
    $region55: #{tpu_custom_call.1} parent=1 // pred_check_branch
      %131 = sbr.rel (0) target = $region57
    $region56: #{tpu_custom_call.1} parent=1 // pred_region
      %132 = dma.done [#allocation12], 384
    $region57: #{tpu_custom_call.1} parent=1 // pred_fallthru
      _
    // Predicated region
    $region58: #{tpu_custom_call.1} parent=1 // pred_check
      _
    $region59: #{tpu_custom_call.1} parent=1 // pred_check_branch
      %134 = sbr.rel (0) target = $region61
    $region60: #{tpu_custom_call.1} parent=1 // pred_region
      %135 = dma.done [#allocation12], 384
    $region61: #{tpu_custom_call.1} parent=1 // pred_fallthru
      _
    // Predicated region
    $region62: #{tpu_custom_call.1} parent=1 // pred_check
      _
    $region63: #{tpu_custom_call.1} parent=1 // pred_check_branch
      %137 = sbr.rel (0) target = $region65
    $region64: #{tpu_custom_call.1} parent=1 // pred_region
      %138 = dma.done [#allocation15], 384
    $region65: #{tpu_custom_call.1} parent=1 // pred_fallthru
      _
    %v139 = vld [vmem:[#allocation2] sm:$0xff]
    %v140 = vld [vmem:[#allocation2 + $0x8] sm:$0xff]
    %v141 = vld [vmem:[#allocation2 + $0x10] sm:$0xf]
    %v142 = vld [vmem:[#allocation5] sm:$0xff]
    %v143 = vld [vmem:[#allocation5 + $0x8] sm:$0xff]
    %v144 = vld [vmem:[#allocation5 + $0x10] sm:$0xf]
    %v145 = vadd.f32 %v142, 0.125
    %v146 = vadd.f32 %v143, 0.125
    %v147 = vadd.f32 %v144, 0.125
    %148 = vadd.xlane.f32.xlu0 %v145
    %v149 = vpop.xlane.xlu0 %148
    %150 = vadd.xlane.f32.xlu0 %v146
    %v151 = vpop.xlane.xlu0 %150
    %vm152 = vcmask 1043456
    %v153 = vsel %vm152, %v147, 0.0
    %154 = vadd.xlane.f32.xlu0 %v153
    %v155 = vpop.xlane.xlu0 %154
    %v156 = vrcp.pop %v149
    %v157 = vmul.f32 1.0, %v156
    %v158 = vrcp.pop %v151
    %v159 = vmul.f32 1.0, %v158
    %v160 = vrcp.pop %v155
    %v161 = vmul.f32 1.0, %v160
    %v162 = vmul.f32 %v145, %v157
    %v163 = vmul.f32 %v146, %v159
    %v164 = vmul.f32 %v147, %v161
    %v165 = vmul.f32 %v162, %v139
    %v166 = vmul.f32 %v163, %v140
    %v167 = vmul.f32 %v164, %v141
    %168 = vadd.xlane.f32.xlu0 %v165
    %v169 = vpop.xlane.xlu0 %168
    %170 = vadd.xlane.f32.xlu0 %v166
    %v171 = vpop.xlane.xlu0 %170
    %v172 = vsel %vm152, %v167, 0.0
    %173 = vadd.xlane.f32.xlu0 %v172
    %v174 = vpop.xlane.xlu0 %173
    %v175 = vsub.f32 0.0, %v169
    %v176 = vsub.f32 0.0, %v171
    %v177 = vsub.f32 0.0, %v174
    %v178 = vld [vmem:[#allocation7] sm:$0xff]
    %v179 = vld [vmem:[#allocation7 + $0x8] sm:$0xff]
    %v180 = vld [vmem:[#allocation7 + $0x10] sm:$0xf]
    %v181 = vld [vmem:[#allocation8] sm:$0xff]
    %v182 = vld [vmem:[#allocation8 + $0x8] sm:$0xff]
    %v183 = vld [vmem:[#allocation8 + $0x10] sm:$0xf]
    %v184 = vmul.f32 %v181, 1.442695
    %v185 = vpow.pop %v184
    %v186 = vmul.f32 %v182, 1.442695
    %v187 = vpow.pop %v186
    %v188 = vmul.f32 %v183, 1.442695
    %v189 = vpow.pop %v188
    %v190 = vld [vmem:[#allocation10] sm:$0xff]
    %v191 = vld [vmem:[#allocation10 + $0x8] sm:$0xff]
    %v192 = vld [vmem:[#allocation10 + $0x10] sm:$0xf]
    %v193 = vld [vmem:[#allocation11] sm:$0xff]
    %v194 = vld [vmem:[#allocation11 + $0x8] sm:$0xff]
    %v195 = vld [vmem:[#allocation11 + $0x10] sm:$0xf]
    %v196 = vsub.f32 0.0, %v193
    %v197 = vsub.f32 0.0, %v194
    %v198 = vsub.f32 0.0, %v195
    %v199 = vmul.f32 %v196, 1.442695
    %v200 = vpow.pop %v199
    %v201 = vmul.f32 %v197, 1.442695
    %v202 = vpow.pop %v201
    %v203 = vmul.f32 %v198, 1.442695
    %v204 = vpow.pop %v203
    %v205 = vadd.f32 %v181, 1.0
    %v206 = vadd.f32 %v182, 1.0
    %v207 = vadd.f32 %v183, 1.0
    %v208 = vsub.f32 %v205, %v193
    %v209 = vsub.f32 %v206, %v194
    %v210 = vsub.f32 %v207, %v195
    %v211 = vsub.f32 %v178, %v190
    %v212 = vsub.f32 %v179, %v191
    %v213 = vsub.f32 %v180, %v192
    %v214 = vmul.f32 %v211, %v211
    %v215 = vmul.f32 %v212, %v212
    %v216 = vmul.f32 %v213, %v213
    %v217 = vadd.f32 %v185, %v214
    %v218 = vadd.f32 %v187, %v215
    %v219 = vadd.f32 %v189, %v216
    %v220 = vmul.f32 %v217, %v200
    %v221 = vmul.f32 %v218, %v202
    %v222 = vmul.f32 %v219, %v204
    %v223 = vsub.f32 %v208, %v220
    %v224 = vsub.f32 %v209, %v221
    %v225 = vsub.f32 %v210, %v222
    %vm226 = vcmask 523264
    %v227 = vsel %vm226, %v223, 0.0
    %228 = vadd.xlane.f32.xlu0 %v227
    %v229 = vpop.xlane.xlu0 %228
    %v230 = vsel %vm226, %v224, 0.0
    %231 = vadd.xlane.f32.xlu0 %v230
    %v232 = vpop.xlane.xlu0 %231
    %vm233 = vcmask 519168
    %v234 = vsel %vm233, %v225, 0.0
    %235 = vadd.xlane.f32.xlu0 %v234
    %v236 = vpop.xlane.xlu0 %235
    %v237 = vld [vmem:[#allocation13] sm:$0xff]
    %v238 = vld [vmem:[#allocation13 + $0x8] sm:$0xff]
    %v239 = vld [vmem:[#allocation13 + $0x10] sm:$0xf]
    %v240 = vld [vmem:[#allocation14] sm:$0xff]
    %v241 = vld [vmem:[#allocation14 + $0x8] sm:$0xff]
    %v242 = vld [vmem:[#allocation14 + $0x10] sm:$0xf]
    %v243 = vsub.f32 0.0, %v240
    %v244 = vsub.f32 0.0, %v241
    %v245 = vsub.f32 0.0, %v242
    %v246 = vmul.f32 %v243, 1.442695
    %v247 = vpow.pop %v246
    %v248 = vmul.f32 %v244, 1.442695
    %v249 = vpow.pop %v248
    %v250 = vmul.f32 %v245, 1.442695
    %v251 = vpow.pop %v250
    %v252 = vsub.f32 %v205, %v240
    %v253 = vsub.f32 %v206, %v241
    %v254 = vsub.f32 %v207, %v242
    %v255 = vsub.f32 %v178, %v237
    %v256 = vsub.f32 %v179, %v238
    %v257 = vsub.f32 %v180, %v239
    %v258 = vmul.f32 %v255, %v255
    %v259 = vmul.f32 %v256, %v256
    %v260 = vmul.f32 %v257, %v257
    %v261 = vadd.f32 %v185, %v258
    %v262 = vadd.f32 %v187, %v259
    %v263 = vadd.f32 %v189, %v260
    %v264 = vmul.f32 %v261, %v247
    %v265 = vmul.f32 %v262, %v249
    %v266 = vmul.f32 %v263, %v251
    %v267 = vsub.f32 %v252, %v264
    %v268 = vsub.f32 %v253, %v265
    %v269 = vsub.f32 %v254, %v266
    %v270 = vsel %vm226, %v267, 0.0
    %271 = vadd.xlane.f32.xlu0 %v270
    %v272 = vpop.xlane.xlu0 %271
    %v273 = vsel %vm226, %v268, 0.0
    %274 = vadd.xlane.f32.xlu0 %v273
    %v275 = vpop.xlane.xlu0 %274
    %v276 = vsel %vm233, %v269, 0.0
    %277 = vadd.xlane.f32.xlu0 %v276
    %v278 = vpop.xlane.xlu0 %277
    %vm279 = vcmask 7168
    %v280 = vsel %vm279, %v175, 0.0
    %v281 = vsel %vm279, %v176, 0.0
    %v282 = vadd.f32 %v280, %v281
    %vm283 = vcmask 3072
    %v284 = vsel %vm283, %v177, 0.0
    %v285 = vadd.f32 %v282, %v284
    %286 = vadd.xlane.f32.xlu0 %v285
    %v287 = vpop.xlane.xlu0 %286
    %v288 = vrot.slane %v287, 4
    %v289 = vadd.f32 %v287, %v288
    %v290 = vrot.slane %v289, 2
    %v291 = vadd.f32 %v289, %v290
    %v292 = vrot.slane %v291, 1
    %v293 = vadd.f32 %v291, %v292
    %s294 = vtos %v293
    %v295 = vsel %vm279, %v229, 0.0
    %v296 = vsel %vm279, %v232, 0.0
    %v297 = vadd.f32 %v295, %v296
    %v298 = vsel %vm283, %v236, 0.0
    %v299 = vadd.f32 %v297, %v298
    %300 = vadd.xlane.f32.xlu0 %v299
    %v301 = vpop.xlane.xlu0 %300
    %v302 = vrot.slane %v301, 4
    %v303 = vadd.f32 %v301, %v302
    %v304 = vrot.slane %v303, 2
    %v305 = vadd.f32 %v303, %v304
    %v306 = vrot.slane %v305, 1
    %v307 = vadd.f32 %v305, %v306
    %s308 = vtos %v307
    %v309 = vsel %vm279, %v272, 0.0
    %v310 = vsel %vm279, %v275, 0.0
    %v311 = vadd.f32 %v309, %v310
    %v312 = vsel %vm283, %v278, 0.0
    %v313 = vadd.f32 %v311, %v312
    %314 = vadd.xlane.f32.xlu0 %v313
    %v315 = vpop.xlane.xlu0 %314
    %v316 = vrot.slane %v315, 4
    %v317 = vadd.f32 %v315, %v316
    %v318 = vrot.slane %v317, 2
    %v319 = vadd.f32 %v317, %v318
    %v320 = vrot.slane %v319, 1
    %v321 = vadd.f32 %v319, %v320
    %s322 = vtos %v321
    %v323 = vlaneseq
    %v324 = vshrl.u32 %v323, 7
    %v325 = vlaneseq
    %v326 = vand.u32 %v325, 127
    %vm327 = vcmp.eq.s32.totalorder %v324, 0
    %vm328 = vcmp.eq.s32.totalorder %v326, 0
    %vm329 = vmand %vm327, %vm328
    %v330 = vstv %s294
    %v331 = vsel %vm329, %v330, 0.0
    %vm332 = vcmp.eq.s32.totalorder %v326, 1
    %vm333 = vmand %vm327, %vm332
    %v334 = vstv %s308
    %v335 = vsel %vm333, %v334, 0.0
    %v336 = vadd.f32 %v331, %v335
    %vm337 = vcmp.eq.s32.totalorder %v326, 2
    %vm338 = vmand %vm327, %vm337
    %v339 = vstv %s322
    %v340 = vsel %vm338, %v339, 0.0
    %v341 = vadd.f32 %v336, %v340
    %342 = vst [vmem:[#allocation16] sm:$0xff] %v341
    // Predicated region
    $region66: #{tpu_custom_call.1} parent=1 // pred_check
      _
    $region67: #{tpu_custom_call.1} parent=1 // pred_check_branch
      %344 = sbr.rel (0) target = $region69
    $region68: #{tpu_custom_call.1} parent=1 // pred_region
      %s346 = ssub.s32 128, 128
      %347 = vsyncadd [#allocation4], %s346
      %s349 = sshll.u32 [#allocation16], 4
      %s350 = int_to_ptr.vmem [resolvable:$true] %s349
      %352 = dma.vmem_to_hbm [thread:$0]  %s350, 128, %s8, [#allocation4]
    $region69: #{tpu_custom_call.1} parent=1 // pred_fallthru
      _
    // Predicated region
    $region70: #{tpu_custom_call.1} parent=1 // pred_check
      _
    $region71: #{tpu_custom_call.1} parent=1 // pred_check_branch
      %354 = sbr.rel (0) target = $region73
    $region72: #{tpu_custom_call.1} parent=1 // pred_region
      %355 = dma.done [#allocation4], 128
    $region73: #{tpu_custom_call.1} parent=1 // pred_fallthru
      _
    %356 = vsyncpa [#allocation3], 1
    %357 = vsyncpa [#allocation6], 1
    %358 = vsyncpa [#allocation9], 1
    %359 = vsyncpa [#allocation12], 1
    %360 = vsyncpa [#allocation15], 1
    %361 = vsyncpa [#allocation4], 1

</llo_original>
